<compile_context>
chip_gen: v7x
topology: tpu7x:2x2x1
jax: 0.10.0
libtpu: 0.0.40
codegen_flags: <defaults>
</compile_context>

<pallas_src>
import numpy as np
import jax
import jax.numpy as jnp
from jax import lax
from jax.experimental import pallas as pl
from jax.experimental.pallas import tpu as pltpu


def _make_kernel(margin: float, max_violation: bool, tile_rows: int, n: int):
    """Build the ContrastiveLoss kernel (cosine_sim measure).

    Grid axis 0 walks row-tiles of `im`.  s^T and the precomputed diagonal have
    constant block indices, so they are DMA'd into VMEM once and stay resident.
    The (1,1) output block is also constant -> it acts as a scalar accumulator
    across the reduction ("arbitrary") grid axis.
    """

    def kernel(im_ref, st_ref, diag_ref, out_ref, colmax_ref):
        pid = pl.program_id(0)
        last = pl.num_programs(0) - 1

        @pl.when(pid == 0)
        def _init():
            out_ref[...] = jnp.zeros_like(out_ref)
            colmax_ref[...] = jnp.zeros_like(colmax_ref)

        # (tile_rows, N) block of the cosine score matrix; f32 accumulation on MXU.
        scores = jnp.dot(im_ref[...], st_ref[...],
                         preferred_element_type=jnp.float32)

        # Diagonal bookkeeping without any lane<->sublane relayout:
        #   d1[i] = scores[i, i] for rows of this tile -> masked lane-reduce of
        #           the tile we already hold in vregs
        #   d2[j] = scores[j, j] for every column      -> precomputed row vector
        row0 = pid * tile_rows
        col_ids = lax.broadcasted_iota(jnp.int32, (tile_rows, n), 1)
        row_ids = lax.broadcasted_iota(jnp.int32, (tile_rows, n), 0) + row0
        on_diag = col_ids == row_ids

        zero = jnp.float32(0.0)
        d1 = jnp.sum(jnp.where(on_diag, scores, zero), axis=1, keepdims=True)  # (tile,1)
        d2 = diag_ref[...]                                                     # (1, N)

        cost_s = jnp.maximum(margin + scores - d1, zero)    # caption retrieval
        cost_im = jnp.maximum(margin + scores - d2, zero)   # image retrieval
        cost_s = jnp.where(on_diag, zero, cost_s)           # masked_fill_(I, 0)
        cost_im = jnp.where(on_diag, zero, cost_im)

        if max_violation:
            # hardest negatives: per-row max summed, running per-column max
            row_max = jnp.max(cost_s, axis=1, keepdims=True)            # (tile,1)
            out_ref[...] += jnp.sum(row_max, axis=0, keepdims=True)     # (1,1)
            colmax_ref[...] = jnp.maximum(
                colmax_ref[...], jnp.max(cost_im, axis=0, keepdims=True))

            @pl.when(pid == last)
            def _finalize():
                out_ref[...] += jnp.sum(colmax_ref[...], axis=1, keepdims=True)
        else:
            partial = jnp.sum(cost_s + cost_im, axis=1, keepdims=True)  # (tile,1)
            out_ref[...] += jnp.sum(partial, axis=0, keepdims=True)     # (1,1)

    return kernel


def _pick_tile(n):
    for t in (256, 128, 64, 32, 16, 8):
        if n % t == 0:
            return t
    return n  # tiny batch: single full block (block == full dims is legal)


def contrastive_loss(im, s, *, margin=0.0, max_violation=False, tile_rows=None):
    """Forward pass of ContrastiveLoss with the default cosine_sim measure."""
    # TODO(synk): measure='order' (order_sim) branch is not implemented; only
    # the default cosine_sim path is provided.
    im = im.astype(jnp.float32)
    s = s.astype(jnp.float32)
    n, d = im.shape
    assert s.shape == (n, d), "im and s must both be (N, D)"

    if tile_rows is None:
        tile_rows = _pick_tile(n)
    assert n % tile_rows == 0, "tile_rows must divide the batch size"

    # One-time layout prep in XLA (glue) so the kernel never transposes:
    s_t = s.T                                   # (D, N)
    diag = jnp.sum(im * s, axis=1)[None, :]     # (1, N): scores[j, j]

    grid = (n // tile_rows,)
    kernel = _make_kernel(float(margin), bool(max_violation), int(tile_rows), int(n))

    out = pl.pallas_call(
        kernel,
        out_shape=jax.ShapeDtypeStruct((1, 1), jnp.float32),
        grid_spec=pltpu.PrefetchScalarGridSpec(
            num_scalar_prefetch=0,
            grid=grid,
            in_specs=[
                pl.BlockSpec((tile_rows, d), lambda i: (i, 0)),   # im row tile
                pl.BlockSpec((d, n), lambda i: (0, 0)),           # s^T, resident
                pl.BlockSpec((1, n), lambda i: (0, 0)),           # diag, resident
            ],
            out_specs=pl.BlockSpec((1, 1), lambda i: (0, 0)),
            scratch_shapes=[pltpu.VMEM((1, n), jnp.float32)],     # running col max
        ),
        compiler_params=pltpu.CompilerParams(
            dimension_semantics=("arbitrary",),   # scalar-accumulator reduction axis
            vmem_limit_bytes=32 * 1024 * 1024,    # fits v5e/v6e/v7x scoped VMEM
        ),
    )(im, s_t, diag)
    return out[0, 0]


def reference_contrastive_loss(im, s, *, margin=0.0, max_violation=False):
    """Pure-JAX reference mirroring the PyTorch forward."""
    scores = jnp.dot(im, s.T, precision=lax.Precision.HIGHEST)
    diagonal = jnp.diag(scores)[:, None]
    d1 = diagonal            # expand over columns
    d2 = diagonal.T          # expand over rows
    cost_s = jnp.maximum(margin + scores - d1, 0.0)
    cost_im = jnp.maximum(margin + scores - d2, 0.0)
    eye = jnp.eye(scores.shape[0], dtype=bool)
    cost_s = jnp.where(eye, 0.0, cost_s)
    cost_im = jnp.where(eye, 0.0, cost_im)
    if max_violation:
        return jnp.max(cost_s, axis=1).sum() + jnp.max(cost_im, axis=0).sum()
    return cost_s.sum() + cost_im.sum()


if __name__ == "__main__":
    # small deterministic configuration: 128 image/caption pairs, 256-d embeds
    N, D = 128, 256
    TILE = 32   # 4 grid steps -> exercises the pipelined, accumulated reduction

    key = jax.random.PRNGKey(0)
    k_im, k_s = jax.random.split(key)

    def l2norm(x):
        return x * lax.rsqrt(jnp.sum(x * x, axis=1, keepdims=True) + 1e-12)

    im = l2norm(jax.random.normal(k_im, (N, D), jnp.float32))
    s = l2norm(jax.random.normal(k_s, (N, D), jnp.float32))

    margin = 0.2

    # default path: cosine_sim, max_violation=False
    loss = jax.block_until_ready(
        contrastive_loss(im, s, margin=margin, max_violation=False,
                         tile_rows=TILE))
    ref = reference_contrastive_loss(im, s, margin=margin, max_violation=False)
    np.testing.assert_allclose(float(loss), float(ref), rtol=2e-4, atol=1e-3)

    # hardest-negative (max_violation=True) path
    loss_mv = jax.block_until_ready(
        contrastive_loss(im, s, margin=margin, max_violation=True,
                         tile_rows=TILE))
    ref_mv = reference_contrastive_loss(im, s, margin=margin, max_violation=True)
    np.testing.assert_allclose(float(loss_mv), float(ref_mv), rtol=2e-4, atol=1e-3)

    print("KERNEL_OK")
</pallas_src>

<mosaic_0001>
module attributes {stable_mosaic.version = 11 : i64} {
  func.func @kernel(%arg0: i32, %arg1: memref<32x256xf32, #tpu.memory_space<vmem>>, %arg2: memref<256x128xf32, #tpu.memory_space<vmem>>, %arg3: memref<1x128xf32, #tpu.memory_space<vmem>>, %arg4: memref<1x1xf32, #tpu.memory_space<vmem>>, %arg5: memref<1x128xf32, #tpu.memory_space<vmem>>) attributes {dimension_semantics = [#tpu.dimension_semantics<arbitrary>], iteration_bounds = array<i64: 4>, scalar_prefetch = 0 : i64, scratch_operands = 1 : i64, tpu.core_type = #tpu.core_type<tc>, window_params = [{transform_indices = @transform_0, window_bounds = array<i64: 32, 256>}, {pipeline_mode = #tpu.pipeline_mode<synchronous>, transform_indices = @transform_1, window_bounds = array<i64: 256, 128>}, {pipeline_mode = #tpu.pipeline_mode<synchronous>, transform_indices = @transform_2, window_bounds = array<i64: 1, 128>}, {pipeline_mode = #tpu.pipeline_mode<synchronous>, transform_indices = @transform_3, window_bounds = array<i64: 1, 1>}]} {
    %c0_i32 = arith.constant 0 : i32
    %0 = arith.cmpi eq, %arg0, %c0_i32 : i32
    %1 = arith.extui %0 : i1 to i32
    %c0_i32_0 = arith.constant 0 : i32
    %2 = arith.cmpi ne, %1, %c0_i32_0 : i32
    scf.if %2 {
      %cst_20 = arith.constant 0.000000e+00 : f32
      %41 = vector.broadcast %cst_20 : f32 to vector<1x1xf32>
      %c0_21 = arith.constant 0 : index
      %c0_22 = arith.constant 0 : index
      %42 = vector.load %arg4[%c0_21, %c0_22] : memref<1x1xf32, #tpu.memory_space<vmem>>, vector<1x1xf32>
      tpu.vector_store %arg4[%c0_21, %c0_22], %41 {strides = array<i32>} : memref<1x1xf32, #tpu.memory_space<vmem>>, vector<1x1xf32>,
      %cst_23 = arith.constant 0.000000e+00 : f32
      %43 = vector.broadcast %cst_23 : f32 to vector<1x128xf32>
      %c0_24 = arith.constant 0 : index
      %c0_25 = arith.constant 0 : index
      %44 = vector.load %arg5[%c0_24, %c0_25] : memref<1x128xf32, #tpu.memory_space<vmem>>, vector<1x128xf32>
      tpu.vector_store %arg5[%c0_24, %c0_25], %43 {strides = array<i32>} : memref<1x128xf32, #tpu.memory_space<vmem>>, vector<1x128xf32>,
    } else {
    }
    %c0 = arith.constant 0 : index
    %c0_1 = arith.constant 0 : index
    %3 = vector.load %arg1[%c0, %c0_1] : memref<32x256xf32, #tpu.memory_space<vmem>>, vector<32x256xf32>
    %c0_2 = arith.constant 0 : index
    %c0_3 = arith.constant 0 : index
    %4 = vector.load %arg2[%c0_2, %c0_3] : memref<256x128xf32, #tpu.memory_space<vmem>>, vector<256x128xf32>
    %cst = arith.constant dense<0.000000e+00> : vector<32x128xf32>
    %5 = tpu.matmul %3, %4, %cst {dimension_numbers = #tpu.dot_dimension_numbers<[1], [0], [0], [1], [0, 0, 1, 1], [], []>} : vector<32x256xf32>, vector<256x128xf32>, vector<32x128xf32> -> vector<32x128xf32>
    %c32_i32 = arith.constant 32 : i32
    %6 = arith.muli %arg0, %c32_i32 : i32
    %7 = tpu.iota {dimensions = array<i32: 1>} : vector<32x128xi32>
    %8 = tpu.iota {dimensions = array<i32: 0>} : vector<32x128xi32>
    %9 = vector.broadcast %6 : i32 to vector<32x128xi32>
    %10 = arith.addi %8, %9 : vector<32x128xi32>
    %11 = arith.cmpi eq, %7, %10 : vector<32x128xi32>
    %cst_4 = arith.constant 0.000000e+00 : f32
    %12 = vector.broadcast %cst_4 : f32 to vector<32x128xf32>
    %13 = arith.select %11, %5, %12 : vector<32x128xi1>, vector<32x128xf32>
    %cst_5 = arith.constant dense<0.000000e+00> : vector<32xf32>
    %14 = vector.multi_reduction <add>, %13, %cst_5 [1] : vector<32x128xf32> to vector<32xf32>
    %15 = vector.shape_cast %14 : vector<32xf32> to vector<32x1xf32>
    %c0_6 = arith.constant 0 : index
    %c0_7 = arith.constant 0 : index
    %16 = vector.load %arg3[%c0_6, %c0_7] : memref<1x128xf32, #tpu.memory_space<vmem>>, vector<1x128xf32>
    %cst_8 = arith.constant 2.000000e-01 : f32
    %17 = vector.broadcast %cst_8 : f32 to vector<32x128xf32>
    %18 = arith.addf %17, %5 : vector<32x128xf32>
    %19 = vector.broadcast %15 : vector<32x1xf32> to vector<32x128xf32>
    %20 = arith.subf %18, %19 : vector<32x128xf32>
    %cst_9 = arith.constant 0.000000e+00 : f32
    %21 = vector.broadcast %cst_9 : f32 to vector<32x128xf32>
    %22 = arith.maximumf %20, %21 : vector<32x128xf32>
    %cst_10 = arith.constant 2.000000e-01 : f32
    %23 = vector.broadcast %cst_10 : f32 to vector<32x128xf32>
    %24 = arith.addf %23, %5 : vector<32x128xf32>
    %25 = vector.broadcast %16 : vector<1x128xf32> to vector<32x128xf32>
    %26 = arith.subf %24, %25 : vector<32x128xf32>
    %cst_11 = arith.constant 0.000000e+00 : f32
    %27 = vector.broadcast %cst_11 : f32 to vector<32x128xf32>
    %28 = arith.maximumf %26, %27 : vector<32x128xf32>
    %cst_12 = arith.constant 0.000000e+00 : f32
    %29 = vector.broadcast %cst_12 : f32 to vector<32x128xf32>
    %30 = arith.select %11, %29, %22 : vector<32x128xi1>, vector<32x128xf32>
    %cst_13 = arith.constant 0.000000e+00 : f32
    %31 = vector.broadcast %cst_13 : f32 to vector<32x128xf32>
    %32 = arith.select %11, %31, %28 : vector<32x128xi1>, vector<32x128xf32>
    %33 = arith.addf %30, %32 : vector<32x128xf32>
    %cst_14 = arith.constant dense<0.000000e+00> : vector<32xf32>
    %34 = vector.multi_reduction <add>, %33, %cst_14 [1] : vector<32x128xf32> to vector<32xf32>
    %35 = vector.shape_cast %34 : vector<32xf32> to vector<32x1xf32>
    %c0_15 = arith.constant 0 : index
    %c0_16 = arith.constant 0 : index
    %36 = vector.load %arg4[%c0_15, %c0_16] : memref<1x1xf32, #tpu.memory_space<vmem>>, vector<1x1xf32>
    %cst_17 = arith.constant dense<0.000000e+00> : vector<1xf32>
    %37 = vector.multi_reduction <add>, %35, %cst_17 [0] : vector<32x1xf32> to vector<1xf32>
    %38 = vector.shape_cast %37 : vector<1xf32> to vector<1x1xf32>
    %39 = arith.addf %36, %38 : vector<1x1xf32>
    %c0_18 = arith.constant 0 : index
    %c0_19 = arith.constant 0 : index
    %40 = vector.load %arg4[%c0_18, %c0_19] : memref<1x1xf32, #tpu.memory_space<vmem>>, vector<1x1xf32>
    tpu.vector_store %arg4[%c0_18, %c0_19], %39 {strides = array<i32>} : memref<1x1xf32, #tpu.memory_space<vmem>>, vector<1x1xf32>,
    return
  }
  func.func @transform_0(%arg0: i32) -> (i32, i32) {
    %c0_i32 = arith.constant 0 : i32
    %c0_i32_0 = arith.constant 0 : i32
    return %arg0, %c0_i32 : i32, i32
  }
  func.func @transform_1(%arg0: i32) -> (i32, i32) {
    %c0_i32 = arith.constant 0 : i32
    %c0_i32_0 = arith.constant 0 : i32
    %c0_i32_1 = arith.constant 0 : i32
    return %c0_i32, %c0_i32_0 : i32, i32
  }
  func.func @transform_2(%arg0: i32) -> (i32, i32) {
    %c0_i32 = arith.constant 0 : i32
    %c0_i32_0 = arith.constant 0 : i32
    %c0_i32_1 = arith.constant 0 : i32
    return %c0_i32, %c0_i32_0 : i32, i32
  }
  func.func @transform_3(%arg0: i32) -> (i32, i32) {
    %c0_i32 = arith.constant 0 : i32
    %c0_i32_0 = arith.constant 0 : i32
    %c0_i32_1 = arith.constant 0 : i32
    return %c0_i32, %c0_i32_0 : i32, i32
  }
}

</mosaic_0001>

<llo_original>
// kernel: tpu_custom_call.1
$region0: #{tpu_custom_call.1}
  #allocation0 [shape = 'u32[]', space=smem, size = 0x4, offset = 0x4, fixed_abs, tag = 'smem constant byte address 0x4 - core index']
  #allocation1 [shape = 'u32[144,128]{1,0:T(1,128)}', space=vmem, size = 0x12000, scoped, tag = 'internal scratch']
  #allocation2 [shape = 'f32[1,128]{1,0:T(1,128)}', space=vmem, size = 0x200, scoped, tag = 'scratch operand']
  %s0 = inlined_call_operand.hbm [shape: f32[128,256], index: 0, kind: input, shape index: {}]
  %s1 = inlined_call_operand.hbm [shape: f32[256,128], index: 1, kind: input, shape index: {}]
  %s2 = inlined_call_operand.vmem [shape: f32[1,128], index: 2, kind: input, shape index: {}]
  %s3 = inlined_call_operand.hbm [shape: f32[1,1], index: 3, kind: output, shape index: {}]
  %s4 = sld [smem:[#allocation0]]
  $region57: #{tpu_custom_call.1} parent=0
    _
  %s6 = ssub.s32 1, %s4
  %s7 = scalar_select 0, %s6, %s4
  $region1: #{tpu_custom_call.1} parent=0
    #allocation3 [shape = 'u8[65536]{0}', space=vmem, size = 0x10000, scoped, tag = 'input window, operand 0']
    #allocation4 [shape = 's32[2]{0}', space=sflag, size = 0x8, scoped, tag = 'scoped memory for tpu_custom_call.1']
    #allocation5 [shape = 's32[2]{0}', space=sflag, size = 0x8, scoped, tag = 'scoped memory for tpu_custom_call.1']
    #allocation6 [shape = 'u8[131072]{0}', space=vmem, size = 0x20000, scoped, tag = 'input window, operand 1, single buffered']
    #allocation7 [shape = 's32[1]{0}', space=sflag, size = 0x4, scoped, tag = 'scoped memory for tpu_custom_call.1']
    #allocation8 [shape = 'u8[512]{0}', space=vmem, size = 0x400, scoped, tag = 'output window, operand 0, single buffered']
    %8 = vsyncpa [#allocation4], 0
    %s9 = scalar_lea.sflag [#allocation4], 1
    %10 = vsyncpa %s9, 0
    %11 = vsyncpa [#allocation7], 0
    %12 = vsyncpa [#allocation5], 0
    loop: start=0, step=1, limit=6
    $region2: #{tpu_custom_call.1} parent=1 // loop_pre_header
      _
    $region3: #{tpu_custom_call.1} parent=1 // loop_header
      %s14 = sphi 0, %s18
      %p15 = scmp.ge.s32.totalorder %s14, 6
      %s24 = sphi 0, %s26
      %s27 = sphi 0, %s24
      %s28 = sphi 0, %s27
      %s44 = sphi 0, %s28
      %s48 = sphi 0, %s48
      %s50 = sphi 0, %s48
      %s51 = sphi 0, %s50
      %s65 = sphi 0, %s51
      %s69 = sphi 0, %s69
      %s71 = sphi 0, %s69
      %s72 = sphi 0, %s71
      %s86 = sphi 0, %s72
      %s90 = sphi 0, %s90
      %s92 = sphi 0, %s90
      %s93 = sphi 0, %s92
      %s107 = sphi 0, %s93
    $region4: #{tpu_custom_call.1} parent=1 // loop_header_branch
      %17 = sbr.rel (%p15) target = $region8
    $region5: #{tpu_custom_call.1} parent=1 // loop_body
      %s19 = ssub.s32 %s14, 1
      %s20 = ssub.s32 %s14, 2
      %s21 = sadd.s32 %s14, 1
      %s22 = ssub.s32 %s14, %s21
      %p23 = scmp.eq.s32.totalorder %s22, 0
      %s25 = sadd.s32 %s24, 1
      %s26 = scalar_select %p23, %s24, %s25
      %p29 = pneg %p23
      %p30 = scmp.eq.s32.totalorder %s14, 3
      %p31 = por %p29, %p30
      %p32 = scmp.ne.s32.totalorder %s24, %s27
      %p33 = scmp.eq.s32.totalorder %s14, 0
      %p34 = por %p32, %p33
      %p35 = scmp.ne.s32.totalorder %s24, %s27
      %p36 = scmp.eq.s32.totalorder %s19, 3
      %p37 = por %p35, %p36
      %p38 = scmp.ne.s32.totalorder %s27, %s28
      %p39 = scmp.eq.s32.totalorder %s19, 0
      %p40 = por %p38, %p39
      %p41 = scmp.ne.s32.totalorder %s27, %s28
      %p42 = scmp.eq.s32.totalorder %s20, 3
      %p43 = por %p41, %p42
      %p45 = scmp.ne.s32.totalorder %s28, %s44
      %p46 = scmp.eq.s32.totalorder %s20, 0
      %p47 = por %p45, %p46
      %s49 = sadd.s32 %s48, 1
      %p52 = scmp.eq.s32.totalorder %s14, 3
      %p53 = scmp.ne.s32.totalorder %s48, %s50
      %p54 = scmp.eq.s32.totalorder %s14, 0
      %p55 = por %p53, %p54
      %p56 = scmp.ne.s32.totalorder %s48, %s50
      %p57 = scmp.eq.s32.totalorder %s19, 3
      %p58 = por %p56, %p57
      %p59 = scmp.ne.s32.totalorder %s50, %s51
      %p60 = scmp.eq.s32.totalorder %s19, 0
      %p61 = por %p59, %p60
      %p62 = scmp.ne.s32.totalorder %s50, %s51
      %p63 = scmp.eq.s32.totalorder %s20, 3
      %p64 = por %p62, %p63
      %p66 = scmp.ne.s32.totalorder %s51, %s65
      %p67 = scmp.eq.s32.totalorder %s20, 0
      %p68 = por %p66, %p67
      %s70 = sadd.s32 %s69, 1
      %p73 = scmp.eq.s32.totalorder %s14, 3
      %p74 = scmp.ne.s32.totalorder %s69, %s71
      %p75 = scmp.eq.s32.totalorder %s14, 0
      %p76 = por %p74, %p75
      %p77 = scmp.ne.s32.totalorder %s69, %s71
      %p78 = scmp.eq.s32.totalorder %s19, 3
      %p79 = por %p77, %p78
      %p80 = scmp.ne.s32.totalorder %s71, %s72
      %p81 = scmp.eq.s32.totalorder %s19, 0
      %p82 = por %p80, %p81
      %p83 = scmp.ne.s32.totalorder %s71, %s72
      %p84 = scmp.eq.s32.totalorder %s20, 3
      %p85 = por %p83, %p84
      %p87 = scmp.ne.s32.totalorder %s72, %s86
      %p88 = scmp.eq.s32.totalorder %s20, 0
      %p89 = por %p87, %p88
      %s91 = sadd.s32 %s90, 1
      %p94 = scmp.eq.s32.totalorder %s14, 3
      %p95 = scmp.ne.s32.totalorder %s90, %s92
      %p96 = scmp.eq.s32.totalorder %s14, 0
      %p97 = por %p95, %p96
      %p98 = scmp.ne.s32.totalorder %s90, %s92
      %p99 = scmp.eq.s32.totalorder %s19, 3
      %p100 = por %p98, %p99
      %p101 = scmp.ne.s32.totalorder %s92, %s93
      %p102 = scmp.eq.s32.totalorder %s19, 0
      %p103 = por %p101, %p102
      %p104 = scmp.ne.s32.totalorder %s92, %s93
      %p105 = scmp.eq.s32.totalorder %s20, 3
      %p106 = por %p104, %p105
      %p108 = scmp.ne.s32.totalorder %s93, %s107
      %p109 = scmp.eq.s32.totalorder %s20, 0
      %p110 = por %p108, %p109
      %p111 = scmp.le.s32.totalorder 1, %s14
      %p112 = scmp.lt.s32.totalorder %s14, 5
      %p113 = pnand %p111, %p112
      %p114 = pneg %p113
      // Predicated region
      $region9: #{tpu_custom_call.1} parent=5 // pred_check
        _
      $region10: #{tpu_custom_call.1} parent=5 // pred_check_branch
        %116 = sbr.rel (%p113) target = $region12
      $region11: #{tpu_custom_call.1} parent=5 // pred_region
        %s117 = ssub.s32 %s14, 1
        // Predicated region
        $region13: #{tpu_custom_call.1} parent=11 // pred_check
          %p118 = pneg %p61
        $region14: #{tpu_custom_call.1} parent=11 // pred_check_branch
          %120 = sbr.rel (%p118) target = $region16
        $region15: #{tpu_custom_call.1} parent=11 // pred_region
          %s122 = ssub.s32 4096, 4096
          %123 = vsyncadd [#allocation7], %s122
          %s124 = sshll.u32 [#allocation6], 4
          %s125 = int_to_ptr.vmem [resolvable:$true] %s124
          %130 = dma.hbm_to_vmem [thread:$0]  %s1, 4096, %s125, [#allocation7], 128, 128, 8
        $region16: #{tpu_custom_call.1} parent=11 // pred_fallthru
          _
        // Predicated region
        $region17: #{tpu_custom_call.1} parent=11 // pred_check
          %p131 = pneg %p82
        $region18: #{tpu_custom_call.1} parent=11 // pred_check_branch
          %133 = sbr.rel (%p131) target = $region20
        $region19: #{tpu_custom_call.1} parent=11 // pred_region
          _
        $region20: #{tpu_custom_call.1} parent=11 // pred_fallthru
          _
      $region12: #{tpu_custom_call.1} parent=5 // pred_fallthru
        _
      %p134 = scmp.lt.s32.totalorder %s14, 4
      // Predicated region
      $region21: #{tpu_custom_call.1} parent=5 // pred_check
        %p135 = pneg %p134
      $region22: #{tpu_custom_call.1} parent=5 // pred_check_branch
        %137 = sbr.rel (%p135) target = $region24
      $region23: #{tpu_custom_call.1} parent=5 // pred_region
        // Predicated region
        $region25: #{tpu_custom_call.1} parent=23 // pred_check
          %p138 = pneg %p34
        $region26: #{tpu_custom_call.1} parent=23 // pred_check_branch
          %140 = sbr.rel (%p138) target = $region28
        $region27: #{tpu_custom_call.1} parent=23 // pred_region
          %s141 = sand.u32 %s24, 1
          %s142 = scalar_lea.sflag [#allocation4], %s141
          %s143 = sand.u32 %s24, 1
          %s144 = smul.addr %s143, 64
          %s145 = scalar_lea.vmem [#allocation3], %s144
          %s146 = smul.u32 4, %s14
          %s148 = ssub.s32 1024, 1024
          %149 = vsyncadd %s142, %s148
          %s150 = smul.addr %s146, 2
          %s151 = smul.addr %s150, 128
          %s152 = scalar_lea.hbm %s0, %s151
          %s153 = sshll.u32 %s145, 4
          %s154 = int_to_ptr.vmem [resolvable:$true] %s153
          %159 = dma.hbm_to_vmem [thread:$0]  %s152, 1024, %s154, %s142, 256, 256, 16
        $region28: #{tpu_custom_call.1} parent=23 // pred_fallthru
          _
      $region24: #{tpu_custom_call.1} parent=5 // pred_fallthru
        _
      %p160 = scmp.le.s32.totalorder 1, %s14
      %p161 = scmp.lt.s32.totalorder %s14, 5
      %p162 = pnand %p160, %p161
      %p163 = pneg %p162
      // Predicated region
      $region29: #{tpu_custom_call.1} parent=5 // pred_check
        _
      $region30: #{tpu_custom_call.1} parent=5 // pred_check_branch
        %165 = sbr.rel (%p162) target = $region32
      $region31: #{tpu_custom_call.1} parent=5 // pred_region
        %s166 = ssub.s32 %s14, 1
        %s167 = sand.u32 %s27, 1
        %s168 = scalar_lea.sflag [#allocation4], %s167
        %s169 = sand.u32 %s27, 1
        %s170 = smul.addr %s169, 64
        %s171 = scalar_lea.vmem [#allocation3], %s170
        // Predicated region
        $region33: #{tpu_custom_call.1} parent=31 // pred_check
          %p172 = pneg %p40
        $region34: #{tpu_custom_call.1} parent=31 // pred_check_branch
          %174 = sbr.rel (%p172) target = $region36
        $region35: #{tpu_custom_call.1} parent=31 // pred_region
          %175 = dma.done %s168, 1024
        $region36: #{tpu_custom_call.1} parent=31 // pred_fallthru
          _
        // Predicated region
        $region37: #{tpu_custom_call.1} parent=31 // pred_check
          %p176 = pneg %p61
        $region38: #{tpu_custom_call.1} parent=31 // pred_check_branch
          %178 = sbr.rel (%p176) target = $region40
        $region39: #{tpu_custom_call.1} parent=31 // pred_region
          %179 = dma.done [#allocation7], 4096
        $region40: #{tpu_custom_call.1} parent=31 // pred_fallthru
          _
        %s180 = sand.u32 %s27, 1
        %s181 = scalar_lea.sflag [#allocation4], %s180
        %s182 = sand.u32 %s27, 1
        %s183 = smul.addr %s182, 64
        %s184 = scalar_lea.vmem [#allocation3], %s183
        %p185 = pneg %p40
        %p186 = pneg %p37
        %p187 = pneg %p61
        %p188 = pneg %p58
        %p189 = pneg %p82
        %p190 = pneg %p79
        %p191 = pneg %p103
        %p192 = pneg %p100
        %s193 = smul.u32 4, %s19
        %p194 = scmp.eq.s32.totalorder %s19, 0
        // Predicated region
        $region41: #{tpu_custom_call.1} parent=31 // pred_check
          %p195 = pneg %p194
        $region42: #{tpu_custom_call.1} parent=31 // pred_check_branch
          %197 = sbr.rel (%p195) target = $region44
        $region43: #{tpu_custom_call.1} parent=31 // pred_region
          %vm198 = vcmask 0
          %199 = vst.msk [vmem:[#allocation8] sm:$0x1] %vm198, 0.0
          %200 = vst [vmem:[#allocation2] sm:$0x1] 0.0
        $region44: #{tpu_custom_call.1} parent=31 // pred_fallthru
          _
        %v201 = vld [vmem:[%s171] sm:$0xff]
        %v202 = vld [vmem:[%s171 + $0x8] sm:$0xff]
        %v203 = vld [vmem:[%s171 + $0x10] sm:$0xff]
        %v204 = vld [vmem:[%s171 + $0x18] sm:$0xff]
        %v205 = vld [vmem:[%s171 + $0x20] sm:$0xff]
        %v206 = vld [vmem:[%s171 + $0x28] sm:$0xff]
        %v207 = vld [vmem:[%s171 + $0x30] sm:$0xff]
        %v208 = vld [vmem:[%s171 + $0x38] sm:$0xff]
        %v209 = vld [vmem:[#allocation6] sm:$0xff]
        %v210 = vld [vmem:[#allocation6 + $0x8] sm:$0xff]
        %v211 = vld [vmem:[#allocation6 + $0x10] sm:$0xff]
        %v212 = vld [vmem:[#allocation6 + $0x18] sm:$0xff]
        %v213 = vld [vmem:[#allocation6 + $0x20] sm:$0xff]
        %v214 = vld [vmem:[#allocation6 + $0x28] sm:$0xff]
        %v215 = vld [vmem:[#allocation6 + $0x30] sm:$0xff]
        %v216 = vld [vmem:[#allocation6 + $0x38] sm:$0xff]
        %v217 = vld [vmem:[#allocation6 + $0x40] sm:$0xff]
        %v218 = vld [vmem:[#allocation6 + $0x48] sm:$0xff]
        %v219 = vld [vmem:[#allocation6 + $0x50] sm:$0xff]
        %v220 = vld [vmem:[#allocation6 + $0x58] sm:$0xff]
        %v221 = vld [vmem:[#allocation6 + $0x60] sm:$0xff]
        %v222 = vld [vmem:[#allocation6 + $0x68] sm:$0xff]
        %v223 = vld [vmem:[#allocation6 + $0x70] sm:$0xff]
        %v224 = vld [vmem:[#allocation6 + $0x78] sm:$0xff]
        %v225 = vld [vmem:[#allocation6 + $0x80] sm:$0xff]
        %v226 = vld [vmem:[#allocation6 + $0x88] sm:$0xff]
        %v227 = vld [vmem:[#allocation6 + $0x90] sm:$0xff]
        %v228 = vld [vmem:[#allocation6 + $0x98] sm:$0xff]
        %v229 = vld [vmem:[#allocation6 + $0xa0] sm:$0xff]
        %v230 = vld [vmem:[#allocation6 + $0xa8] sm:$0xff]
        %v231 = vld [vmem:[#allocation6 + $0xb0] sm:$0xff]
        %v232 = vld [vmem:[#allocation6 + $0xb8] sm:$0xff]
        %v233 = vld [vmem:[#allocation6 + $0xc0] sm:$0xff]
        %v234 = vld [vmem:[#allocation6 + $0xc8] sm:$0xff]
        %v235 = vld [vmem:[#allocation6 + $0xd0] sm:$0xff]
        %v236 = vld [vmem:[#allocation6 + $0xd8] sm:$0xff]
        %v237 = vld [vmem:[#allocation6 + $0xe0] sm:$0xff]
        %v238 = vld [vmem:[#allocation6 + $0xe8] sm:$0xff]
        %v239 = vld [vmem:[#allocation6 + $0xf0] sm:$0xff]
        %v240 = vld [vmem:[#allocation6 + $0xf8] sm:$0xff]
        %241 = vmatprep.subr.mxu0 0.0
        %242 = vmatpush1.msra.mxu0 %v209
        %243 = vmatprep.subr.mxu0 0.0
        %244 = vmatpush1.msra.mxu0 %v210
        %245 = vmatprep.subr.mxu0 0.0
        %246 = vmatpush1.msra.mxu0 %v211
        %247 = vmatprep.subr.mxu0 0.0
        %248 = vmatpush1.msra.mxu0 %v212
        %249 = vmatprep.subr.mxu0 0.0
        %250 = vmatpush1.msra.mxu0 %v213
        %251 = vmatprep.subr.mxu0 0.0
        %252 = vmatpush1.msra.mxu0 %v214
        %253 = vmatprep.subr.mxu0 0.0
        %254 = vmatpush1.msra.mxu0 %v215
        %255 = vmatprep.subr.mxu0 0.0
        %256 = vmatpush1.msra.mxu0 %v216
        %257 = vmatprep.subr.mxu0 0.0
        %258 = vmatpush1.msra.mxu0 %v217
        %259 = vmatprep.subr.mxu0 0.0
        %260 = vmatpush1.msra.mxu0 %v218
        %261 = vmatprep.subr.mxu0 0.0
        %262 = vmatpush1.msra.mxu0 %v219
        %263 = vmatprep.subr.mxu0 0.0
        %264 = vmatpush1.msra.mxu0 %v220
        %265 = vmatprep.subr.mxu0 0.0
        %266 = vmatpush1.msra.mxu0 %v221
        %267 = vmatprep.subr.mxu0 0.0
        %268 = vmatpush1.msra.mxu0 %v222
        %269 = vmatprep.subr.mxu0 0.0
        %270 = vmatpush1.msra.mxu0 %v223
        %271 = vmatprep.subr.mxu0 0.0
        %272 = vmatpush1.msra.mxu0 %v224
        %273 = vmatprep.subr.mxu0 0.0
        %274 = vmatpush1.msra.mxu0 %v225
        %275 = vmatprep.subr.mxu0 0.0
        %276 = vmatpush1.msra.mxu0 %v226
        %277 = vmatprep.subr.mxu0 0.0
        %278 = vmatpush1.msra.mxu0 %v227
        %279 = vmatprep.subr.mxu0 0.0
        %280 = vmatpush1.msra.mxu0 %v228
        %281 = vmatprep.subr.mxu0 0.0
        %282 = vmatpush1.msra.mxu0 %v229
        %283 = vmatprep.subr.mxu0 0.0
        %284 = vmatpush1.msra.mxu0 %v230
        %285 = vmatprep.subr.mxu0 0.0
        %286 = vmatpush1.msra.mxu0 %v231
        %287 = vmatprep.subr.mxu0 0.0
        %288 = vmatpush1.msra.mxu0 %v232
        %289 = vmatprep.subr.mxu0 0.0
        %290 = vmatpush1.msra.mxu0 %v233
        %291 = vmatprep.subr.mxu0 0.0
        %292 = vmatpush1.msra.mxu0 %v234
        %293 = vmatprep.subr.mxu0 0.0
        %294 = vmatpush1.msra.mxu0 %v235
        %295 = vmatprep.subr.mxu0 0.0
        %296 = vmatpush1.msra.mxu0 %v236
        %297 = vmatprep.subr.mxu0 0.0
        %298 = vmatpush1.msra.mxu0 %v237
        %299 = vmatprep.subr.mxu0 0.0
        %300 = vmatpush1.msra.mxu0 %v238
        %301 = vmatprep.subr.mxu0 0.0
        %302 = vmatpush1.msra.mxu0 %v239
        %303 = vmatprep.subr.mxu0 0.0
        %304 = vmatpush1.msra.mxu0 %v240
        %305 = vmatprep.mubr.f32.mxu0 %v202
        %306 = vmatmul.mubr.f32.gmra.mrb[0].mxu0 %v201
        %v307 = vpop.f32.mrb[0].mxu0
        %v308 = vadd.f32 0.0, %v307
        %v309 = vpop.f32.mrb[0].mxu0
        %310 = vmatprep.mubr.f32.mxu0 %v204
        %311 = vmatmul.mubr.f32.gmra.mrb[0].mxu0 %v203
        %v312 = vpop.f32.mrb[0].mxu0
        %v313 = vadd.f32 0.0, %v312
        %v314 = vpop.f32.mrb[0].mxu0
        %315 = vmatprep.mubr.f32.mxu0 %v206
        %316 = vmatmul.mubr.f32.gmra.mrb[0].mxu0 %v205
        %v317 = vpop.f32.mrb[0].mxu0
        %v318 = vadd.f32 0.0, %v317
        %v319 = vpop.f32.mrb[0].mxu0
        %320 = vmatprep.mubr.f32.mxu0 %v208
        %321 = vmatmul.mubr.f32.gmra.mrb[0].mxu0 %v207
        %v322 = vpop.f32.mrb[0].mxu0
        %v323 = vadd.f32 0.0, %v322
        %v324 = vpop.f32.mrb[0].mxu0
        %325 = vdwg.mxu0
        %s326 = smul.u32 %s19, 32
        %v327 = vlaneseq
        %v328 = vand.u32 %v327, 127
        %v329 = vlaneseq
        %v330 = vshrl.u32 %v329, 7
        %v331 = vadd.s32 %v330, 8
        %v332 = vadd.s32 %v330, 16
        %v333 = vadd.s32 %v330, 24
        %v334 = vstv %s326
        %v335 = vadd.s32 %v330, %v334
        %v336 = vadd.s32 %v331, %v334
        %v337 = vadd.s32 %v332, %v334
        %v338 = vadd.s32 %v333, %v334
        %vm339 = vcmp.eq.s32.totalorder %v328, %v335
        %vm340 = vcmp.eq.s32.totalorder %v328, %v336
        %vm341 = vcmp.eq.s32.totalorder %v328, %v337
        %vm342 = vcmp.eq.s32.totalorder %v328, %v338
        %v343 = vsel %vm339, %v308, 0.0
        %v344 = vsel %vm340, %v313, 0.0
        %v345 = vsel %vm341, %v318, 0.0
        %v346 = vsel %vm342, %v323, 0.0
        %347 = vadd.xlane.f32.xlu0 %v343
        %v348 = vpop.xlane.xlu0 %347
        %349 = vadd.xlane.f32.xlu0 %v344
        %v350 = vpop.xlane.xlu0 %349
        %351 = vadd.xlane.f32.xlu0 %v345
        %v352 = vpop.xlane.xlu0 %351
        %353 = vadd.xlane.f32.xlu0 %v346
        %v354 = vpop.xlane.xlu0 %353
        %v355 = vld [vmem:[%s2] sm:$0x1]
        %v356 = vadd.f32 %v308, 0.2
        %v357 = vadd.f32 %v313, 0.2
        %v358 = vadd.f32 %v318, 0.2
        %v359 = vadd.f32 %v323, 0.2
        %v360 = vsub.f32 %v356, %v348
        %v361 = vsub.f32 %v357, %v350
        %v362 = vsub.f32 %v358, %v352
        %v363 = vsub.f32 %v359, %v354
        %v364 = vmax.f32 %v360, 0.0
        %v365 = vmax.f32 %v361, 0.0
        %v366 = vmax.f32 %v362, 0.0
        %v367 = vmax.f32 %v363, 0.0
        %v369 = vlaneseq
        %v370 = vshrl.u32 %v369, 7
        %v371 = vsub.s32 0, %v370
        %v372 = vrot.slane %v355, %v371
        %v374 = vsub.f32 %v356, %v372
        %v375 = vsub.f32 %v357, %v372
        %v376 = vsub.f32 %v358, %v372
        %v377 = vsub.f32 %v359, %v372
        %v378 = vmax.f32 %v374, 0.0
        %v379 = vmax.f32 %v375, 0.0
        %v380 = vmax.f32 %v376, 0.0
        %v381 = vmax.f32 %v377, 0.0
        %v382 = vsel %vm339, 0.0, %v364
        %v383 = vsel %vm340, 0.0, %v365
        %v384 = vsel %vm341, 0.0, %v366
        %v385 = vsel %vm342, 0.0, %v367
        %v386 = vsel %vm339, 0.0, %v378
        %v387 = vsel %vm340, 0.0, %v379
        %v388 = vsel %vm341, 0.0, %v380
        %v389 = vsel %vm342, 0.0, %v381
        %v390 = vadd.f32 %v382, %v386
        %v391 = vadd.f32 %v383, %v387
        %v392 = vadd.f32 %v384, %v388
        %v393 = vadd.f32 %v385, %v389
        %394 = vadd.xlane.f32.xlu0 %v390
        %v395 = vpop.xlane.xlu0 %394
        %396 = vadd.xlane.f32.xlu0 %v391
        %v397 = vpop.xlane.xlu0 %396
        %398 = vadd.xlane.f32.xlu0 %v392
        %v399 = vpop.xlane.xlu0 %398
        %400 = vadd.xlane.f32.xlu0 %v393
        %v401 = vpop.xlane.xlu0 %400
        %v402 = vld [vmem:[#allocation8] sm:$0x1]
        %v403 = vadd.f32 %v395, %v397
        %v404 = vadd.f32 %v403, %v399
        %v405 = vadd.f32 %v404, %v401
        %v406 = vrot.slane %v405, 4
        %v407 = vadd.f32 %v405, %v406
        %v408 = vrot.slane %v407, 2
        %v409 = vadd.f32 %v407, %v408
        %v410 = vrot.slane %v409, 1
        %v411 = vadd.f32 %v409, %v410
        %v412 = vadd.f32 %v402, %v411
        %vm413 = vcmask 0
        %414 = vst.msk [vmem:[#allocation8] sm:$0x1] %vm413, %v412
        // Predicated region
        $region45: #{tpu_custom_call.1} parent=31 // pred_check
          %p415 = pneg %p100
        $region46: #{tpu_custom_call.1} parent=31 // pred_check_branch
          %417 = sbr.rel (%p415) target = $region48
        $region47: #{tpu_custom_call.1} parent=31 // pred_region
          %s419 = ssub.s32 16, 16
          %420 = vsyncadd [#allocation5], %s419
          %s422 = sshll.u32 [#allocation8], 4
          %s423 = int_to_ptr.vmem [resolvable:$true] %s422
          %425 = dma.vmem_to_hbm [thread:$0]  %s423, 16, %s3, [#allocation5]
        $region48: #{tpu_custom_call.1} parent=31 // pred_fallthru
          _
        // Predicated region
        $region49: #{tpu_custom_call.1} parent=31 // pred_check
          %p426 = pneg %p100
        $region50: #{tpu_custom_call.1} parent=31 // pred_check_branch
          %428 = sbr.rel (%p426) target = $region52
        $region51: #{tpu_custom_call.1} parent=31 // pred_region
          %429 = dma.done [#allocation5], 16
        $region52: #{tpu_custom_call.1} parent=31 // pred_fallthru
          _
      $region32: #{tpu_custom_call.1} parent=5 // pred_fallthru
        _
      %p430 = scmp.le.s32.totalorder 2, %s14
      // Predicated region
      $region53: #{tpu_custom_call.1} parent=5 // pred_check
        %p431 = pneg %p430
      $region54: #{tpu_custom_call.1} parent=5 // pred_check_branch
        %433 = sbr.rel (%p431) target = $region56
      $region55: #{tpu_custom_call.1} parent=5 // pred_region
        %s434 = ssub.s32 %s14, 2
      $region56: #{tpu_custom_call.1} parent=5 // pred_fallthru
        _
    $region6: #{tpu_custom_call.1} parent=1 // loop_footer
      %s18 = sadd.s32 1, %s14
    $region7: #{tpu_custom_call.1} parent=1 // loop_footer_branch
      %13 = sbr.rel target = $region3
    $region8: #{tpu_custom_call.1} parent=1 // loop_exit
      _
    %435 = vsyncpa [#allocation4], 1
    %s436 = scalar_lea.sflag [#allocation4], 1
    %437 = vsyncpa %s436, 1
    %438 = vsyncpa [#allocation7], 1
    %439 = vsyncpa [#allocation5], 1
    %s440 = scalar_lea.sflag [#allocation5], 1
    %441 = vsyncpa %s440, 1

</llo_original>
